<compile_context>
chip_gen: v7x
topology: tpu7x:2x2x1
jax: 0.10.0
libtpu: 0.0.40
codegen_flags: <defaults>
</compile_context>

<pallas_src>
import jax
import jax.numpy as jnp
from jax.experimental import pallas as pl
from jax.experimental.pallas import tpu as pltpu


def _side_gain_imager_kernel(a_ref, cn_ref, cp_ref, x_ref, o_ref):
    # a_ref, cn_ref, cp_ref: (TR, 1) f32 coefficient columns.
    # x_ref, o_ref:          (TR, TL) tiles of the dense (2B, L) slab,
    #                        rows ordered [L0, R0, L1, R1, ...].
    x = x_ref[...]
    tr = x_ref.shape[0]
    # Sublane rotations (XLU): nxt[r] = x[(r+1) % TR], prv[r] = x[(r-1) % TR].
    nxt = pltpu.roll(x, shift=tr - 1, axis=0)
    prv = pltpu.roll(x, shift=1, axis=0)
    # Even rows (left):  out = a*L + c*R   (c carried by cn; cp == 0 there)
    # Odd  rows (right): out = a*R + c*L   (c carried by cp; cn == 0 there)
    # Coefficients are 0 on tile-wrap rows' unused neighbor, so wrap is harmless.
    out = a_ref[...] * x + cn_ref[...] * nxt + cp_ref[...] * prv
    o_ref[...] = out.astype(o_ref.dtype)      # single dense full-tile store


def _pick_row_tile(rows, cap=64):
    """Largest multiple-of-8 divisor of `rows` (rows % 8 == 0) that is <= cap."""
    best = 8
    d = 8
    while d <= min(rows, cap):
        if rows % d == 0:
            best = d
        d += 8
    return best


def side_gain_imager(input_signals, log_gain, *, row_tile=None, lane_tile=None):
    """input_signals: (B, 2, L); log_gain: (B, 1) or (B,). Returns (B, 2, L)."""
    B, C, L = input_signals.shape
    assert C == 2, "SideGainImager requires stereo input"
    out_dtype = input_signals.dtype

    # ---- tiny per-batch coefficient precompute (wrapper side) -------------
    g = jnp.exp(jnp.asarray(log_gain, jnp.float32).reshape(B, 1))   # (B, 1)
    a = 0.5 * (1.0 + g)                                             # same-row coef
    c = 0.5 * (1.0 - g)                                             # partner-row coef
    a_col = jnp.repeat(a, 2, axis=0)                                # (2B, 1)
    c_col = jnp.repeat(c, 2, axis=0)                                # (2B, 1)
    even = (jnp.arange(2 * B) % 2 == 0).astype(jnp.float32)[:, None]
    cn_col = c_col * even                    # partner = next row (even / left rows)
    cp_col = c_col * (1.0 - even)            # partner = prev row (odd / right rows)

    # ---- dense (2B, L) view; pad rows to a multiple of 8 if needed --------
    R = 2 * B
    x2 = input_signals.reshape(R, L)         # free, contiguous
    R_pad = ((R + 7) // 8) * 8
    if R_pad != R:
        pad = ((0, R_pad - R), (0, 0))
        x2 = jnp.pad(x2, pad)
        a_col = jnp.pad(a_col, pad)
        cn_col = jnp.pad(cn_col, pad)
        cp_col = jnp.pad(cp_col, pad)

    # ---- tile selection ----------------------------------------------------
    if row_tile is None:
        TR = _pick_row_tile(R_pad)
    else:
        TR = int(row_tile)
        assert TR % 8 == 0 and R_pad % TR == 0, "row_tile must be a mult-of-8 divisor"
    if lane_tile is None:
        target_elems = (2 * 1024 * 1024) // 4 // TR   # ~2 MiB f32 per input tile
        if target_elems >= L:
            TL = L
        else:
            TL = min(L, max(128, (target_elems // 128) * 128))
    else:
        TL = int(lane_tile)
        assert TL == L or TL % 128 == 0

    grid = (pl.cdiv(R_pad, TR), pl.cdiv(L, TL))

    coef_spec = pl.BlockSpec((TR, 1), lambda i, j: (i, 0))    # reused across j
    data_spec = pl.BlockSpec((TR, TL), lambda i, j: (i, j))

    out2 = pl.pallas_call(
        _side_gain_imager_kernel,
        out_shape=jax.ShapeDtypeStruct((R_pad, L), out_dtype),
        grid=grid,
        in_specs=[coef_spec, coef_spec, coef_spec, data_spec],
        out_specs=data_spec,
        compiler_params=pltpu.CompilerParams(
            dimension_semantics=("parallel", "parallel"),
            vmem_limit_bytes=32 * 1024 * 1024,
        ),
    )(a_col, cn_col, cp_col, x2)

    if R_pad != R:
        out2 = out2[:R]
    return out2.reshape(B, 2, L)


def _reference(input_signals, log_gain):
    left, right = input_signals[:, 0, :], input_signals[:, 1, :]
    mid, side = left + right, left - right
    gain = jnp.exp(jnp.asarray(log_gain, jnp.float32).reshape(-1, 1))
    side = gain * side
    return jnp.stack([(mid + side) / 2, (mid - side) / 2], axis=1)


if __name__ == "__main__":
    key = jax.random.PRNGKey(0)

    # Small shapes exercising the different tilings / paddings.
    configs = [
        (2, 2048, {}),                      # R=4 -> padded to 8 rows, single tile
        (4, 4096, dict(lane_tile=1024)),    # grid over L, coef blocks reused
        (16, 512, dict(row_tile=8)),        # grid over row tiles
        (3, 1000, {}),                      # odd batch, non-128-multiple L
    ]

    for idx, (B, L, kw) in enumerate(configs):
        key, k_x, k_g = jax.random.split(key, 3)
        x = jax.random.normal(k_x, (B, 2, L), dtype=jnp.float32)
        log_gain = 0.3 * jax.random.normal(k_g, (B, 1), dtype=jnp.float32)

        out = jax.block_until_ready(side_gain_imager(x, log_gain, **kw))
        ref = _reference(x, log_gain)

        assert out.shape == (B, 2, L), f"bad shape in config {idx}"
        assert jnp.allclose(out, ref, atol=1e-5, rtol=1e-5), f"mismatch in config {idx}"

    print("KERNEL_OK")
</pallas_src>

<mosaic_0001>
module attributes {stable_mosaic.version = 11 : i64} {
  func.func @_side_gain_imager_kernel(%arg0: i32, %arg1: i32, %arg2: memref<8x1xf32, #tpu.memory_space<vmem>>, %arg3: memref<8x1xf32, #tpu.memory_space<vmem>>, %arg4: memref<8x1xf32, #tpu.memory_space<vmem>>, %arg5: memref<8x2048xf32, #tpu.memory_space<vmem>>, %arg6: memref<8x2048xf32, #tpu.memory_space<vmem>>) attributes {dimension_semantics = [#tpu.dimension_semantics<parallel>, #tpu.dimension_semantics<parallel>], iteration_bounds = array<i64: 1, 1>, scalar_prefetch = 0 : i64, scratch_operands = 0 : i64, tpu.core_type = #tpu.core_type<tc>, window_params = [{transform_indices = @transform_0, window_bounds = array<i64: 8, 1>}, {transform_indices = @transform_1, window_bounds = array<i64: 8, 1>}, {transform_indices = @transform_2, window_bounds = array<i64: 8, 1>}, {transform_indices = @transform_3, window_bounds = array<i64: 8, 2048>}, {transform_indices = @transform_4, window_bounds = array<i64: 8, 2048>}]} {
    %c0 = arith.constant 0 : index
    %c0_0 = arith.constant 0 : index
    %0 = vector.load %arg5[%c0, %c0_0] : memref<8x2048xf32, #tpu.memory_space<vmem>>, vector<8x2048xf32>
    %c7_i32 = arith.constant 7 : i32
    %1 = tpu.dynamic_rotate %0 by %c7_i32 dim 0 : vector<8x2048xf32>, i32 -> vector<8x2048xf32>
    %c1_i32 = arith.constant 1 : i32
    %2 = tpu.dynamic_rotate %0 by %c1_i32 dim 0 : vector<8x2048xf32>, i32 -> vector<8x2048xf32>
    %c0_1 = arith.constant 0 : index
    %c0_2 = arith.constant 0 : index
    %3 = vector.load %arg2[%c0_1, %c0_2] : memref<8x1xf32, #tpu.memory_space<vmem>>, vector<8x1xf32>
    %4 = vector.broadcast %3 : vector<8x1xf32> to vector<8x2048xf32>
    %5 = arith.mulf %4, %0 : vector<8x2048xf32>
    %c0_3 = arith.constant 0 : index
    %c0_4 = arith.constant 0 : index
    %6 = vector.load %arg3[%c0_3, %c0_4] : memref<8x1xf32, #tpu.memory_space<vmem>>, vector<8x1xf32>
    %7 = vector.broadcast %6 : vector<8x1xf32> to vector<8x2048xf32>
    %8 = arith.mulf %7, %1 : vector<8x2048xf32>
    %9 = arith.addf %5, %8 : vector<8x2048xf32>
    %c0_5 = arith.constant 0 : index
    %c0_6 = arith.constant 0 : index
    %10 = vector.load %arg4[%c0_5, %c0_6] : memref<8x1xf32, #tpu.memory_space<vmem>>, vector<8x1xf32>
    %11 = vector.broadcast %10 : vector<8x1xf32> to vector<8x2048xf32>
    %12 = arith.mulf %11, %2 : vector<8x2048xf32>
    %13 = arith.addf %9, %12 : vector<8x2048xf32>
    %c0_7 = arith.constant 0 : index
    %c0_8 = arith.constant 0 : index
    %14 = vector.load %arg6[%c0_7, %c0_8] : memref<8x2048xf32, #tpu.memory_space<vmem>>, vector<8x2048xf32>
    tpu.vector_store %arg6[%c0_7, %c0_8], %13 {strides = array<i32>} : memref<8x2048xf32, #tpu.memory_space<vmem>>, vector<8x2048xf32>,
    return
  }
  func.func @transform_0(%arg0: i32, %arg1: i32) -> (i32, i32) {
    %c0_i32 = arith.constant 0 : i32
    %c0_i32_0 = arith.constant 0 : i32
    return %arg0, %c0_i32 : i32, i32
  }
  func.func @transform_1(%arg0: i32, %arg1: i32) -> (i32, i32) {
    %c0_i32 = arith.constant 0 : i32
    %c0_i32_0 = arith.constant 0 : i32
    return %arg0, %c0_i32 : i32, i32
  }
  func.func @transform_2(%arg0: i32, %arg1: i32) -> (i32, i32) {
    %c0_i32 = arith.constant 0 : i32
    %c0_i32_0 = arith.constant 0 : i32
    return %arg0, %c0_i32 : i32, i32
  }
  func.func @transform_3(%arg0: i32, %arg1: i32) -> (i32, i32) {
    %c0_i32 = arith.constant 0 : i32
    return %arg0, %arg1 : i32, i32
  }
  func.func @transform_4(%arg0: i32, %arg1: i32) -> (i32, i32) {
    %c0_i32 = arith.constant 0 : i32
    return %arg0, %arg1 : i32, i32
  }
}

</mosaic_0001>

<llo_original>
// kernel: tpu_custom_call.1
$region0: #{tpu_custom_call.1}
  #allocation0 [shape = 'u32[]', space=smem, size = 0x4, offset = 0x4, fixed_abs, tag = 'smem constant byte address 0x4 - core index']
  #allocation1 [shape = 'u32[144,128]{1,0:T(1,128)}', space=vmem, size = 0x12000, scoped, tag = 'internal scratch']
  %s0 = inlined_call_operand.vmem [shape: f32[8,1], index: 0, kind: input, shape index: {}]
  %s1 = inlined_call_operand.vmem [shape: f32[8,1], index: 1, kind: input, shape index: {}]
  %s2 = inlined_call_operand.vmem [shape: f32[8,1], index: 2, kind: input, shape index: {}]
  %s3 = inlined_call_operand.hbm [shape: f32[8,2048], index: 3, kind: input, shape index: {}]
  %s4 = inlined_call_operand.hbm [shape: f32[8,2048], index: 4, kind: output, shape index: {}]
  %s5 = sld [smem:[#allocation0]]
  $region30: #{tpu_custom_call.1} parent=0
    _
  %s7 = ssub.s32 1, %s5
  %s8 = scalar_select 0, %s7, %s5
  $region1: #{tpu_custom_call.1} parent=0
    #allocation2 [shape = 'u8[65536]{0}', space=vmem, size = 0x10000, scoped, tag = 'input window, operand 3, single buffered']
    #allocation3 [shape = 's32[1]{0}', space=sflag, size = 0x4, scoped, tag = 'scoped memory for tpu_custom_call.1']
    #allocation4 [shape = 's32[1]{0}', space=sflag, size = 0x4, scoped, tag = 'scoped memory for tpu_custom_call.1']
    #allocation5 [shape = 'u8[65536]{0}', space=vmem, size = 0x10000, scoped, tag = 'output window, operand 0, single buffered']
    %9 = vsyncpa [#allocation3], 0
    %10 = vsyncpa [#allocation4], 0
    // Predicated region
    $region2: #{tpu_custom_call.1} parent=1 // pred_check
      _
    $region3: #{tpu_custom_call.1} parent=1 // pred_check_branch
      %12 = sbr.rel (0) target = $region5
    $region4: #{tpu_custom_call.1} parent=1 // pred_region
      _
    $region5: #{tpu_custom_call.1} parent=1 // pred_fallthru
      _
    // Predicated region
    $region6: #{tpu_custom_call.1} parent=1 // pred_check
      _
    $region7: #{tpu_custom_call.1} parent=1 // pred_check_branch
      %14 = sbr.rel (0) target = $region9
    $region8: #{tpu_custom_call.1} parent=1 // pred_region
      _
    $region9: #{tpu_custom_call.1} parent=1 // pred_fallthru
      _
    // Predicated region
    $region10: #{tpu_custom_call.1} parent=1 // pred_check
      _
    $region11: #{tpu_custom_call.1} parent=1 // pred_check_branch
      %16 = sbr.rel (0) target = $region13
    $region12: #{tpu_custom_call.1} parent=1 // pred_region
      _
    $region13: #{tpu_custom_call.1} parent=1 // pred_fallthru
      _
    // Predicated region
    $region14: #{tpu_custom_call.1} parent=1 // pred_check
      _
    $region15: #{tpu_custom_call.1} parent=1 // pred_check_branch
      %18 = sbr.rel (0) target = $region17
    $region16: #{tpu_custom_call.1} parent=1 // pred_region
      %s20 = ssub.s32 2048, 2048
      %21 = vsyncadd [#allocation3], %s20
      %s23 = sshll.u32 [#allocation2], 4
      %s24 = int_to_ptr.vmem [resolvable:$true] %s23
      %26 = dma.hbm_to_vmem [thread:$0]  %s3, 2048, %s24, [#allocation3]
    $region17: #{tpu_custom_call.1} parent=1 // pred_fallthru
      _
    // Predicated region
    $region18: #{tpu_custom_call.1} parent=1 // pred_check
      _
    $region19: #{tpu_custom_call.1} parent=1 // pred_check_branch
      %28 = sbr.rel (0) target = $region21
    $region20: #{tpu_custom_call.1} parent=1 // pred_region
      %29 = dma.done [#allocation3], 2048
    $region21: #{tpu_custom_call.1} parent=1 // pred_fallthru
      _
    %v30 = vld [vmem:[#allocation2] sm:$0xff]
    %v31 = vld [vmem:[#allocation2 + $0x8] sm:$0xff]
    %v32 = vld [vmem:[#allocation2 + $0x10] sm:$0xff]
    %v33 = vld [vmem:[#allocation2 + $0x18] sm:$0xff]
    %v34 = vld [vmem:[#allocation2 + $0x20] sm:$0xff]
    %v35 = vld [vmem:[#allocation2 + $0x28] sm:$0xff]
    %v36 = vld [vmem:[#allocation2 + $0x30] sm:$0xff]
    %v37 = vld [vmem:[#allocation2 + $0x38] sm:$0xff]
    %v38 = vld [vmem:[#allocation2 + $0x40] sm:$0xff]
    %v39 = vld [vmem:[#allocation2 + $0x48] sm:$0xff]
    %v40 = vld [vmem:[#allocation2 + $0x50] sm:$0xff]
    %v41 = vld [vmem:[#allocation2 + $0x58] sm:$0xff]
    %v42 = vld [vmem:[#allocation2 + $0x60] sm:$0xff]
    %v43 = vld [vmem:[#allocation2 + $0x68] sm:$0xff]
    %v44 = vld [vmem:[#allocation2 + $0x70] sm:$0xff]
    %v45 = vld [vmem:[#allocation2 + $0x78] sm:$0xff]
    %v46 = vrot.slane %v30, 1
    %v47 = vrot.slane %v31, 1
    %v48 = vrot.slane %v32, 1
    %v49 = vrot.slane %v33, 1
    %v50 = vrot.slane %v34, 1
    %v51 = vrot.slane %v35, 1
    %v52 = vrot.slane %v36, 1
    %v53 = vrot.slane %v37, 1
    %v54 = vrot.slane %v38, 1
    %v55 = vrot.slane %v39, 1
    %v56 = vrot.slane %v40, 1
    %v57 = vrot.slane %v41, 1
    %v58 = vrot.slane %v42, 1
    %v59 = vrot.slane %v43, 1
    %v60 = vrot.slane %v44, 1
    %v61 = vrot.slane %v45, 1
    %v62 = vrot.slane %v30, 7
    %v63 = vrot.slane %v31, 7
    %v64 = vrot.slane %v32, 7
    %v65 = vrot.slane %v33, 7
    %v66 = vrot.slane %v34, 7
    %v67 = vrot.slane %v35, 7
    %v68 = vrot.slane %v36, 7
    %v69 = vrot.slane %v37, 7
    %v70 = vrot.slane %v38, 7
    %v71 = vrot.slane %v39, 7
    %v72 = vrot.slane %v40, 7
    %v73 = vrot.slane %v41, 7
    %v74 = vrot.slane %v42, 7
    %v75 = vrot.slane %v43, 7
    %v76 = vrot.slane %v44, 7
    %v77 = vrot.slane %v45, 7
    %v78 = vld [vmem:[%s0] sm:$0xff]
    %80 = vset.pattern.permute.xlu0 0
    %81 = vperm.xlu0 %80, %v78
    %v82 = vpop.permute.xlu0 %81
    %v84 = vmul.f32 %v82, %v30
    %v85 = vmul.f32 %v82, %v31
    %v86 = vmul.f32 %v82, %v32
    %v87 = vmul.f32 %v82, %v33
    %v88 = vmul.f32 %v82, %v34
    %v89 = vmul.f32 %v82, %v35
    %v90 = vmul.f32 %v82, %v36
    %v91 = vmul.f32 %v82, %v37
    %v92 = vmul.f32 %v82, %v38
    %v93 = vmul.f32 %v82, %v39
    %v94 = vmul.f32 %v82, %v40
    %v95 = vmul.f32 %v82, %v41
    %v96 = vmul.f32 %v82, %v42
    %v97 = vmul.f32 %v82, %v43
    %v98 = vmul.f32 %v82, %v44
    %v99 = vmul.f32 %v82, %v45
    %v100 = vld [vmem:[%s1] sm:$0xff]
    %102 = vset.pattern.permute.xlu0 0
    %103 = vperm.xlu0 %102, %v100
    %v104 = vpop.permute.xlu0 %103
    %v106 = vmul.f32 %v104, %v46
    %v107 = vmul.f32 %v104, %v47
    %v108 = vmul.f32 %v104, %v48
    %v109 = vmul.f32 %v104, %v49
    %v110 = vmul.f32 %v104, %v50
    %v111 = vmul.f32 %v104, %v51
    %v112 = vmul.f32 %v104, %v52
    %v113 = vmul.f32 %v104, %v53
    %v114 = vmul.f32 %v104, %v54
    %v115 = vmul.f32 %v104, %v55
    %v116 = vmul.f32 %v104, %v56
    %v117 = vmul.f32 %v104, %v57
    %v118 = vmul.f32 %v104, %v58
    %v119 = vmul.f32 %v104, %v59
    %v120 = vmul.f32 %v104, %v60
    %v121 = vmul.f32 %v104, %v61
    %v122 = vadd.f32 %v84, %v106
    %v123 = vadd.f32 %v85, %v107
    %v124 = vadd.f32 %v86, %v108
    %v125 = vadd.f32 %v87, %v109
    %v126 = vadd.f32 %v88, %v110
    %v127 = vadd.f32 %v89, %v111
    %v128 = vadd.f32 %v90, %v112
    %v129 = vadd.f32 %v91, %v113
    %v130 = vadd.f32 %v92, %v114
    %v131 = vadd.f32 %v93, %v115
    %v132 = vadd.f32 %v94, %v116
    %v133 = vadd.f32 %v95, %v117
    %v134 = vadd.f32 %v96, %v118
    %v135 = vadd.f32 %v97, %v119
    %v136 = vadd.f32 %v98, %v120
    %v137 = vadd.f32 %v99, %v121
    %v138 = vld [vmem:[%s2] sm:$0xff]
    %140 = vset.pattern.permute.xlu0 0
    %141 = vperm.xlu0 %140, %v138
    %v142 = vpop.permute.xlu0 %141
    %v144 = vmul.f32 %v142, %v62
    %v145 = vmul.f32 %v142, %v63
    %v146 = vmul.f32 %v142, %v64
    %v147 = vmul.f32 %v142, %v65
    %v148 = vmul.f32 %v142, %v66
    %v149 = vmul.f32 %v142, %v67
    %v150 = vmul.f32 %v142, %v68
    %v151 = vmul.f32 %v142, %v69
    %v152 = vmul.f32 %v142, %v70
    %v153 = vmul.f32 %v142, %v71
    %v154 = vmul.f32 %v142, %v72
    %v155 = vmul.f32 %v142, %v73
    %v156 = vmul.f32 %v142, %v74
    %v157 = vmul.f32 %v142, %v75
    %v158 = vmul.f32 %v142, %v76
    %v159 = vmul.f32 %v142, %v77
    %v160 = vadd.f32 %v122, %v144
    %v161 = vadd.f32 %v123, %v145
    %v162 = vadd.f32 %v124, %v146
    %v163 = vadd.f32 %v125, %v147
    %v164 = vadd.f32 %v126, %v148
    %v165 = vadd.f32 %v127, %v149
    %v166 = vadd.f32 %v128, %v150
    %v167 = vadd.f32 %v129, %v151
    %v168 = vadd.f32 %v130, %v152
    %v169 = vadd.f32 %v131, %v153
    %v170 = vadd.f32 %v132, %v154
    %v171 = vadd.f32 %v133, %v155
    %v172 = vadd.f32 %v134, %v156
    %v173 = vadd.f32 %v135, %v157
    %v174 = vadd.f32 %v136, %v158
    %v175 = vadd.f32 %v137, %v159
    %176 = vst [vmem:[#allocation5] sm:$0xff] %v160
    %177 = vst [vmem:[#allocation5 + $0x8] sm:$0xff] %v161
    %178 = vst [vmem:[#allocation5 + $0x10] sm:$0xff] %v162
    %179 = vst [vmem:[#allocation5 + $0x18] sm:$0xff] %v163
    %180 = vst [vmem:[#allocation5 + $0x20] sm:$0xff] %v164
    %181 = vst [vmem:[#allocation5 + $0x28] sm:$0xff] %v165
    %182 = vst [vmem:[#allocation5 + $0x30] sm:$0xff] %v166
    %183 = vst [vmem:[#allocation5 + $0x38] sm:$0xff] %v167
    %184 = vst [vmem:[#allocation5 + $0x40] sm:$0xff] %v168
    %185 = vst [vmem:[#allocation5 + $0x48] sm:$0xff] %v169
    %186 = vst [vmem:[#allocation5 + $0x50] sm:$0xff] %v170
    %187 = vst [vmem:[#allocation5 + $0x58] sm:$0xff] %v171
    %188 = vst [vmem:[#allocation5 + $0x60] sm:$0xff] %v172
    %189 = vst [vmem:[#allocation5 + $0x68] sm:$0xff] %v173
    %190 = vst [vmem:[#allocation5 + $0x70] sm:$0xff] %v174
    %191 = vst [vmem:[#allocation5 + $0x78] sm:$0xff] %v175
    // Predicated region
    $region22: #{tpu_custom_call.1} parent=1 // pred_check
      _
    $region23: #{tpu_custom_call.1} parent=1 // pred_check_branch
      %193 = sbr.rel (0) target = $region25
    $region24: #{tpu_custom_call.1} parent=1 // pred_region
      %s195 = ssub.s32 2048, 2048
      %196 = vsyncadd [#allocation4], %s195
      %s198 = sshll.u32 [#allocation5], 4
      %s199 = int_to_ptr.vmem [resolvable:$true] %s198
      %201 = dma.vmem_to_hbm [thread:$0]  %s199, 2048, %s4, [#allocation4]
    $region25: #{tpu_custom_call.1} parent=1 // pred_fallthru
      _
    // Predicated region
    $region26: #{tpu_custom_call.1} parent=1 // pred_check
      _
    $region27: #{tpu_custom_call.1} parent=1 // pred_check_branch
      %203 = sbr.rel (0) target = $region29
    $region28: #{tpu_custom_call.1} parent=1 // pred_region
      %204 = dma.done [#allocation4], 2048
    $region29: #{tpu_custom_call.1} parent=1 // pred_fallthru
      _
    %205 = vsyncpa [#allocation3], 1
    %206 = vsyncpa [#allocation4], 1

</llo_original>
